<compile_context>
chip_gen: v5e
topology: v5e:2x2
jax: 0.10.0
libtpu: 0.0.40
codegen_flags: <defaults>
</compile_context>

<pallas_src>
import math

import jax
import jax.numpy as jnp
from jax.experimental import pallas as pl
from jax.experimental.pallas import tpu as pltpu

_GELU_C = math.sqrt(2.0 / math.pi)


def _gelu_tanh(v):
    """tanh-approx GELU, identical formula to the PyTorch GELU module."""
    return 0.5 * v * (1.0 + jnp.tanh(_GELU_C * (v + 0.044715 * v * v * v)))


def _mlp_kernel(x_ref, w1t_ref, w2t_ref, o_ref):
    """Fused per-row-tile MLP: gelu(gelu(x @ W1t) @ W2t)."""
    x = x_ref[...].astype(jnp.float32)
    h = jnp.dot(x, w1t_ref[...], preferred_element_type=jnp.float32)
    h = _gelu_tanh(h)
    y = jnp.dot(h, w2t_ref[...], preferred_element_type=jnp.float32)
    y = _gelu_tanh(y)
    # TODO(synk): training-mode dropout (pltpu.prng_*) not implemented;
    # forward here matches eval-mode (dropout == identity).
    o_ref[...] = y.astype(o_ref.dtype)


def mlp_small(x: jax.Array, w1: jax.Array, w2: jax.Array, *, block_m: int = 256) -> jax.Array:
    """Pallas equivalent of MLP_small.forward (eval mode).

    x:  (B, S, D) activations.
    w1: (D, D) fc1 weight in PyTorch layout (out, in), no bias.
    w2: (D, D) fc2 weight in PyTorch layout (out, in), no bias.
    """
    B, S, D = x.shape
    M = B * S
    x2 = x.reshape(M, D)
    # nn.Linear (no bias): y = x @ W.T — transpose once in the wrapper so the
    # kernel's matmul is lane-dense along the output feature axis.
    w1t = jnp.transpose(w1)
    w2t = jnp.transpose(w2)

    # Row tile: full M when small (always a valid block), otherwise 256
    # (multiple of 8) with a cdiv grid so the pipeline overlaps compute and
    # writeback and fits comfortably in v7x's 64 MiB VMEM.
    tm = M if M <= block_m else block_m
    grid = (pl.cdiv(M, tm),)

    flops = 2 * 2 * M * D * D                       # two (M,D)x(D,D) matmuls
    transcendentals = 2 * M * D                     # two tanh per output elem
    bytes_accessed = 4 * (2 * M * D + 2 * D * D)    # x in + y out + 2 weights

    out = pl.pallas_call(
        _mlp_kernel,
        out_shape=jax.ShapeDtypeStruct((M, D), x.dtype),
        grid_spec=pltpu.PrefetchScalarGridSpec(
            num_scalar_prefetch=0,
            grid=grid,
            in_specs=[
                pl.BlockSpec((tm, D), lambda i: (i, 0)),   # row tile of x
                pl.BlockSpec((D, D), lambda i: (0, 0)),    # W1.T (resident)
                pl.BlockSpec((D, D), lambda i: (0, 0)),    # W2.T (resident)
            ],
            out_specs=pl.BlockSpec((tm, D), lambda i: (i, 0)),
        ),
        compiler_params=pltpu.CompilerParams(
            dimension_semantics=("parallel",),
        ),
        cost_estimate=pl.CostEstimate(
            flops=flops,
            transcendentals=transcendentals,
            bytes_accessed=bytes_accessed,
        ),
    )(x2, w1t, w2t)
    return out.reshape(B, S, D)


def _reference(x, w1, w2):
    """Pure-JAX reference reproducing the PyTorch MLP_small forward (eval)."""
    h = _gelu_tanh(x @ w1.T)
    return _gelu_tanh(h @ w2.T)


if __name__ == "__main__":
    key = jax.random.PRNGKey(0)
    k1, k2, k3 = jax.random.split(key, 3)

    B, S, D = 2, 8, 32   # batch=2, seq=8, hidden dim=32
    x = jax.random.normal(k1, (B, S, D), dtype=jnp.float32)
    w1 = jax.random.normal(k2, (D, D), dtype=jnp.float32) * (1.0 / math.sqrt(D))
    w2 = jax.random.normal(k3, (D, D), dtype=jnp.float32) * (1.0 / math.sqrt(D))

    out = jax.block_until_ready(mlp_small(x, w1, w2))
    ref = _reference(x, w1, w2)

    assert out.shape == (B, S, D), out.shape
    assert out.dtype == jnp.float32, out.dtype
    assert jnp.allclose(out, ref, atol=1e-5, rtol=1e-5), "mismatch vs reference"

    print("KERNEL_OK")
</pallas_src>

<mosaic_0001>
module attributes {stable_mosaic.version = 11 : i64} {
  func.func @_mlp_kernel(%arg0: i32, %arg1: memref<16x32xf32, #tpu.memory_space<vmem>>, %arg2: memref<32x32xf32, #tpu.memory_space<vmem>>, %arg3: memref<32x32xf32, #tpu.memory_space<vmem>>, %arg4: memref<16x32xf32, #tpu.memory_space<vmem>>) attributes {dimension_semantics = [#tpu.dimension_semantics<parallel>], iteration_bounds = array<i64: 1>, scalar_prefetch = 0 : i64, scratch_operands = 0 : i64, tpu.core_type = #tpu.core_type<tc>, window_params = [{transform_indices = @transform_0, window_bounds = array<i64: 16, 32>}, {pipeline_mode = #tpu.pipeline_mode<synchronous>, transform_indices = @transform_1, window_bounds = array<i64: 32, 32>}, {pipeline_mode = #tpu.pipeline_mode<synchronous>, transform_indices = @transform_2, window_bounds = array<i64: 32, 32>}, {transform_indices = @transform_3, window_bounds = array<i64: 16, 32>}]} {
    %c0 = arith.constant 0 : index
    %c0_0 = arith.constant 0 : index
    %0 = vector.load %arg1[%c0, %c0_0] : memref<16x32xf32, #tpu.memory_space<vmem>>, vector<16x32xf32>
    %c0_1 = arith.constant 0 : index
    %c0_2 = arith.constant 0 : index
    %1 = vector.load %arg2[%c0_1, %c0_2] : memref<32x32xf32, #tpu.memory_space<vmem>>, vector<32x32xf32>
    %cst = arith.constant dense<0.000000e+00> : vector<16x32xf32>
    %2 = tpu.matmul %0, %1, %cst {dimension_numbers = #tpu.dot_dimension_numbers<[1], [0], [0], [1], [0, 0, 1, 1], [], []>} : vector<16x32xf32>, vector<32x32xf32>, vector<16x32xf32> -> vector<16x32xf32>
    %cst_3 = arith.constant 5.000000e-01 : f32
    %3 = vector.broadcast %cst_3 : f32 to vector<16x32xf32>
    %4 = arith.mulf %3, %2 : vector<16x32xf32>
    %cst_4 = arith.constant 4.471500e-02 : f32
    %5 = vector.broadcast %cst_4 : f32 to vector<16x32xf32>
    %6 = arith.mulf %5, %2 : vector<16x32xf32>
    %7 = arith.mulf %6, %2 : vector<16x32xf32>
    %8 = arith.mulf %7, %2 : vector<16x32xf32>
    %9 = arith.addf %2, %8 : vector<16x32xf32>
    %cst_5 = arith.constant 0.797884583 : f32
    %10 = vector.broadcast %cst_5 : f32 to vector<16x32xf32>
    %11 = arith.mulf %10, %9 : vector<16x32xf32>
    %12 = math.tanh %11 : vector<16x32xf32>
    %cst_6 = arith.constant 1.000000e+00 : f32
    %13 = vector.broadcast %cst_6 : f32 to vector<16x32xf32>
    %14 = arith.addf %13, %12 : vector<16x32xf32>
    %15 = arith.mulf %4, %14 : vector<16x32xf32>
    %c0_7 = arith.constant 0 : index
    %c0_8 = arith.constant 0 : index
    %16 = vector.load %arg3[%c0_7, %c0_8] : memref<32x32xf32, #tpu.memory_space<vmem>>, vector<32x32xf32>
    %cst_9 = arith.constant dense<0.000000e+00> : vector<16x32xf32>
    %17 = tpu.matmul %15, %16, %cst_9 {dimension_numbers = #tpu.dot_dimension_numbers<[1], [0], [0], [1], [0, 0, 1, 1], [], []>} : vector<16x32xf32>, vector<32x32xf32>, vector<16x32xf32> -> vector<16x32xf32>
    %cst_10 = arith.constant 5.000000e-01 : f32
    %18 = vector.broadcast %cst_10 : f32 to vector<16x32xf32>
    %19 = arith.mulf %18, %17 : vector<16x32xf32>
    %cst_11 = arith.constant 4.471500e-02 : f32
    %20 = vector.broadcast %cst_11 : f32 to vector<16x32xf32>
    %21 = arith.mulf %20, %17 : vector<16x32xf32>
    %22 = arith.mulf %21, %17 : vector<16x32xf32>
    %23 = arith.mulf %22, %17 : vector<16x32xf32>
    %24 = arith.addf %17, %23 : vector<16x32xf32>
    %cst_12 = arith.constant 0.797884583 : f32
    %25 = vector.broadcast %cst_12 : f32 to vector<16x32xf32>
    %26 = arith.mulf %25, %24 : vector<16x32xf32>
    %27 = math.tanh %26 : vector<16x32xf32>
    %cst_13 = arith.constant 1.000000e+00 : f32
    %28 = vector.broadcast %cst_13 : f32 to vector<16x32xf32>
    %29 = arith.addf %28, %27 : vector<16x32xf32>
    %30 = arith.mulf %19, %29 : vector<16x32xf32>
    %c0_14 = arith.constant 0 : index
    %c0_15 = arith.constant 0 : index
    %31 = vector.load %arg4[%c0_14, %c0_15] : memref<16x32xf32, #tpu.memory_space<vmem>>, vector<16x32xf32>
    tpu.vector_store %arg4[%c0_14, %c0_15], %30 {strides = array<i32>} : memref<16x32xf32, #tpu.memory_space<vmem>>, vector<16x32xf32>,
    return
  }
  func.func @transform_0(%arg0: i32) -> (i32, i32) {
    %c0_i32 = arith.constant 0 : i32
    %c0_i32_0 = arith.constant 0 : i32
    return %arg0, %c0_i32 : i32, i32
  }
  func.func @transform_1(%arg0: i32) -> (i32, i32) {
    %c0_i32 = arith.constant 0 : i32
    %c0_i32_0 = arith.constant 0 : i32
    %c0_i32_1 = arith.constant 0 : i32
    return %c0_i32, %c0_i32_0 : i32, i32
  }
  func.func @transform_2(%arg0: i32) -> (i32, i32) {
    %c0_i32 = arith.constant 0 : i32
    %c0_i32_0 = arith.constant 0 : i32
    %c0_i32_1 = arith.constant 0 : i32
    return %c0_i32, %c0_i32_0 : i32, i32
  }
  func.func @transform_3(%arg0: i32) -> (i32, i32) {
    %c0_i32 = arith.constant 0 : i32
    %c0_i32_0 = arith.constant 0 : i32
    return %arg0, %c0_i32 : i32, i32
  }
}

</mosaic_0001>

<llo_original>
// kernel: tpu_custom_call.1
$region0: #{tpu_custom_call.1}
  #allocation0 [shape = 'u32[]', space=smem, size = 0x4, offset = 0x4, fixed_abs, tag = 'smem constant byte address 0x4 - core index']
  #allocation1 [shape = 'u32[72,128]{1,0:T(1,128)}', space=vmem, size = 0x9000, scoped, tag = 'internal scratch']
  %s0 = inlined_call_operand.hbm [shape: f32[16,32], index: 0, kind: input, shape index: {}]
  %s1 = inlined_call_operand.hbm [shape: f32[32,32], index: 1, kind: input, shape index: {}]
  %s2 = inlined_call_operand.hbm [shape: f32[32,32], index: 2, kind: input, shape index: {}]
  %s3 = inlined_call_operand.hbm [shape: f32[16,32], index: 3, kind: output, shape index: {}]
  %s4 = sld [smem:[#allocation0]]
  $region34: #{tpu_custom_call.1} parent=0
    _
  %s6 = ssub.s32 1, %s4
  %s7 = scalar_select 0, %s6, %s4
  $region1: #{tpu_custom_call.1} parent=0
    #allocation2 [shape = 'u8[8192]{0}', space=vmem, size = 0x2000, scoped, tag = 'input window, operand 0, single buffered']
    #allocation3 [shape = 's32[1]{0}', space=sflag, size = 0x4, scoped, tag = 'scoped memory for tpu_custom_call.1']
    #allocation4 [shape = 's32[1]{0}', space=sflag, size = 0x4, scoped, tag = 'scoped memory for tpu_custom_call.1']
    #allocation5 [shape = 'u8[16384]{0}', space=vmem, size = 0x4000, scoped, tag = 'input window, operand 1, single buffered']
    #allocation6 [shape = 's32[1]{0}', space=sflag, size = 0x4, scoped, tag = 'scoped memory for tpu_custom_call.1']
    #allocation7 [shape = 'u8[16384]{0}', space=vmem, size = 0x4000, scoped, tag = 'input window, operand 2, single buffered']
    #allocation8 [shape = 'u8[8192]{0}', space=vmem, size = 0x2000, scoped, tag = 'output window, operand 0, single buffered']
    %8 = vsyncpa [#allocation3], 0
    %9 = vsyncpa [#allocation6], 0
    %10 = vsyncpa [#allocation4], 0
    // Predicated region
    $region2: #{tpu_custom_call.1} parent=1 // pred_check
      _
    $region3: #{tpu_custom_call.1} parent=1 // pred_check_branch
      %12 = sbr.rel (0) target = $region5
    $region4: #{tpu_custom_call.1} parent=1 // pred_region
      %14 = vsyncadd [#allocation3], 0
      %s15 = sshll.u32 %s0, 4
      %s16 = int_to_ptr.hbm [resolvable:$true] %s15
      %s17 = sshll.u32 [#allocation2], 4
      %s18 = int_to_ptr.vmem [resolvable:$true] %s17
      %23 = dma.hbm_to_vmem [thread:$0]  %s16, 256, %s18, [#allocation3], 128, 128, 8
    $region5: #{tpu_custom_call.1} parent=1 // pred_fallthru
      _
    // Predicated region
    $region6: #{tpu_custom_call.1} parent=1 // pred_check
      _
    $region7: #{tpu_custom_call.1} parent=1 // pred_check_branch
      %25 = sbr.rel (0) target = $region9
    $region8: #{tpu_custom_call.1} parent=1 // pred_region
      %27 = vsyncadd [#allocation6], 0
      %s28 = sshll.u32 %s1, 4
      %s29 = int_to_ptr.hbm [resolvable:$true] %s28
      %s30 = sshll.u32 [#allocation5], 4
      %s31 = int_to_ptr.vmem [resolvable:$true] %s30
      %36 = dma.hbm_to_vmem [thread:$0]  %s29, 512, %s31, [#allocation6], 128, 128, 8
    $region9: #{tpu_custom_call.1} parent=1 // pred_fallthru
      _
    // Predicated region
    $region10: #{tpu_custom_call.1} parent=1 // pred_check
      _
    $region11: #{tpu_custom_call.1} parent=1 // pred_check_branch
      %38 = sbr.rel (0) target = $region13
    $region12: #{tpu_custom_call.1} parent=1 // pred_region
      %40 = vsyncadd [#allocation6], 0
      %s41 = sshll.u32 %s2, 4
      %s42 = int_to_ptr.hbm [resolvable:$true] %s41
      %s43 = sshll.u32 [#allocation7], 4
      %s44 = int_to_ptr.vmem [resolvable:$true] %s43
      %49 = dma.hbm_to_vmem [thread:$0]  %s42, 512, %s44, [#allocation6], 128, 128, 8
    $region13: #{tpu_custom_call.1} parent=1 // pred_fallthru
      _
    // Predicated region
    $region14: #{tpu_custom_call.1} parent=1 // pred_check
      _
    $region15: #{tpu_custom_call.1} parent=1 // pred_check_branch
      %51 = sbr.rel (0) target = $region17
    $region16: #{tpu_custom_call.1} parent=1 // pred_region
      %53 = dma.done [#allocation3], 256
    $region17: #{tpu_custom_call.1} parent=1 // pred_fallthru
      _
    // Predicated region
    $region18: #{tpu_custom_call.1} parent=1 // pred_check
      _
    $region19: #{tpu_custom_call.1} parent=1 // pred_check_branch
      %55 = sbr.rel (0) target = $region21
    $region20: #{tpu_custom_call.1} parent=1 // pred_region
      %57 = dma.done [#allocation6], 512
    $region21: #{tpu_custom_call.1} parent=1 // pred_fallthru
      _
    // Predicated region
    $region22: #{tpu_custom_call.1} parent=1 // pred_check
      _
    $region23: #{tpu_custom_call.1} parent=1 // pred_check_branch
      %59 = sbr.rel (0) target = $region25
    $region24: #{tpu_custom_call.1} parent=1 // pred_region
      %61 = dma.done [#allocation6], 512
    $region25: #{tpu_custom_call.1} parent=1 // pred_fallthru
      _
    %v62 = vld [vmem:[#allocation2] sm:$0xff]
    %v63 = vld [vmem:[#allocation2 + $0x8] sm:$0xff]
    %v64 = vld [vmem:[#allocation5] sm:$0xff]
    %v65 = vld [vmem:[#allocation5 + $0x8] sm:$0xff]
    %v66 = vld [vmem:[#allocation5 + $0x10] sm:$0xff]
    %v67 = vld [vmem:[#allocation5 + $0x18] sm:$0xff]
    %vm68 = vcmask 261120
    %v70 = vsel %vm68, %v62, 0
    %v73 = vsel %vm68, %v63, 0
    %75 = vmatpush.msra.mxu0 0.0
    %76 = vmatpush.msra.mxu0 0.0
    %77 = vmatpush.msra.mxu0 0.0
    %78 = vmatpush.msra.mxu0 0.0
    %79 = vmatpush.msra.mxu0 0.0
    %80 = vmatpush.msra.mxu0 0.0
    %81 = vmatpush.msra.mxu0 0.0
    %82 = vmatpush.msra.mxu0 0.0
    %83 = vmatpush.msra.mxu0 0.0
    %84 = vmatpush.msra.mxu0 0.0
    %85 = vmatpush.msra.mxu0 0.0
    %86 = vmatpush.msra.mxu0 0.0
    %87 = vmatpush.msra.mxu0 %v67
    %88 = vmatpush.msra.mxu0 %v66
    %89 = vmatpush.msra.mxu0 %v65
    %90 = vmatpush.msra.mxu0 %v64
    %91 = vmatmul.f32.gmra.mxu0 %v70
    %v92 = vpop.f32.mrf.mxu0
    %v93 = vadd.f32 0.0, %v92
    %94 = vmatmul.f32.gmra.mxu0 %v73
    %v95 = vpop.f32.mrf.mxu0
    %v96 = vadd.f32 0.0, %v95
    %97 = vdwg.mxu0
    %v98 = vmul.f32 %v93, 0.5
    %v99 = vmul.f32 %v96, 0.5
    %v100 = vmul.f32 %v93, 0.044715
    %v101 = vmul.f32 %v96, 0.044715
    %v102 = vmul.f32 %v100, %v93
    %v103 = vmul.f32 %v101, %v96
    %v104 = vmul.f32 %v102, %v93
    %v105 = vmul.f32 %v103, %v96
    %v106 = vadd.f32 %v93, %v104
    %v107 = vadd.f32 %v96, %v105
    %v108 = vmul.f32 %v106, 0.7978846
    %v109 = vmul.f32 %v107, 0.7978846
    %v110 = vtanh.pop %v108
    %v111 = vtanh.pop %v109
    %v112 = vadd.f32 %v110, 1.0
    %v113 = vadd.f32 %v111, 1.0
    %v114 = vmul.f32 %v98, %v112
    %v115 = vmul.f32 %v99, %v113
    %v116 = vld [vmem:[#allocation7] sm:$0xff]
    %v117 = vld [vmem:[#allocation7 + $0x8] sm:$0xff]
    %v118 = vld [vmem:[#allocation7 + $0x10] sm:$0xff]
    %v119 = vld [vmem:[#allocation7 + $0x18] sm:$0xff]
    %v121 = vsel %vm68, %v114, 0
    %v124 = vsel %vm68, %v115, 0
    %126 = vmatpush.msra.mxu0 0.0
    %127 = vmatpush.msra.mxu0 0.0
    %128 = vmatpush.msra.mxu0 0.0
    %129 = vmatpush.msra.mxu0 0.0
    %130 = vmatpush.msra.mxu0 0.0
    %131 = vmatpush.msra.mxu0 0.0
    %132 = vmatpush.msra.mxu0 0.0
    %133 = vmatpush.msra.mxu0 0.0
    %134 = vmatpush.msra.mxu0 0.0
    %135 = vmatpush.msra.mxu0 0.0
    %136 = vmatpush.msra.mxu0 0.0
    %137 = vmatpush.msra.mxu0 0.0
    %138 = vmatpush.msra.mxu0 %v119
    %139 = vmatpush.msra.mxu0 %v118
    %140 = vmatpush.msra.mxu0 %v117
    %141 = vmatpush.msra.mxu0 %v116
    %142 = vmatmul.f32.gmra.mxu0 %v121
    %v143 = vpop.f32.mrf.mxu0
    %v144 = vadd.f32 0.0, %v143
    %145 = vmatmul.f32.gmra.mxu0 %v124
    %v146 = vpop.f32.mrf.mxu0
    %v147 = vadd.f32 0.0, %v146
    %148 = vdwg.mxu0
    %v149 = vmul.f32 %v144, 0.5
    %v150 = vmul.f32 %v147, 0.5
    %v151 = vmul.f32 %v144, 0.044715
    %v152 = vmul.f32 %v147, 0.044715
    %v153 = vmul.f32 %v151, %v144
    %v154 = vmul.f32 %v152, %v147
    %v155 = vmul.f32 %v153, %v144
    %v156 = vmul.f32 %v154, %v147
    %v157 = vadd.f32 %v144, %v155
    %v158 = vadd.f32 %v147, %v156
    %v159 = vmul.f32 %v157, 0.7978846
    %v160 = vmul.f32 %v158, 0.7978846
    %v161 = vtanh.pop %v159
    %v162 = vtanh.pop %v160
    %v163 = vadd.f32 %v161, 1.0
    %v164 = vadd.f32 %v162, 1.0
    %v165 = vmul.f32 %v149, %v163
    %v166 = vmul.f32 %v150, %v164
    %167 = vst.msk [vmem:[#allocation8] sm:$0xff] %vm68, %v165
    %168 = vst.msk [vmem:[#allocation8 + $0x8] sm:$0xff] %vm68, %v166
    // Predicated region
    $region26: #{tpu_custom_call.1} parent=1 // pred_check
      _
    $region27: #{tpu_custom_call.1} parent=1 // pred_check_branch
      %170 = sbr.rel (0) target = $region29
    $region28: #{tpu_custom_call.1} parent=1 // pred_region
      %172 = vsyncadd [#allocation4], 0
      %s173 = sshll.u32 [#allocation8], 4
      %s174 = int_to_ptr.vmem [resolvable:$true] %s173
      %s175 = sshll.u32 %s3, 4
      %s176 = int_to_ptr.hbm [resolvable:$true] %s175
      %181 = dma.vmem_to_hbm [thread:$0]  %s174, 256, %s176, [#allocation4], 128, 128, 8
    $region29: #{tpu_custom_call.1} parent=1 // pred_fallthru
      _
    // Predicated region
    $region30: #{tpu_custom_call.1} parent=1 // pred_check
      _
    $region31: #{tpu_custom_call.1} parent=1 // pred_check_branch
      %183 = sbr.rel (0) target = $region33
    $region32: #{tpu_custom_call.1} parent=1 // pred_region
      %185 = dma.done [#allocation4], 256
    $region33: #{tpu_custom_call.1} parent=1 // pred_fallthru
      _
    %186 = vsyncpa [#allocation3], 1
    %187 = vsyncpa [#allocation6], 1
    %188 = vsyncpa [#allocation4], 1

</llo_original>
